<compile_context>
chip_gen: v5e
topology: v5e:2x2
jax: 0.10.0
libtpu: 0.0.40
codegen_flags: <defaults>
</compile_context>

<pallas_src>
import jax
import jax.numpy as jnp
from jax import lax
from jax.experimental import pallas as pl
from jax.experimental.pallas import tpu as pltpu


def _quat_predictor_kernel(feat_ref, w_ref, b_ref, out_ref):
    feat = feat_ref[...]                      # (TB, nz_feat), native dtype
    w = w_ref[...]                            # (nz_rot, nz_feat), torch layout

    # quat = feat @ W^T, accumulated in f32 on the MXU.
    quat = lax.dot_general(
        feat, w,
        dimension_numbers=(((1,), (1,)), ((), ())),
        preferred_element_type=jnp.float32,
    )                                         # (TB, nz_rot) f32
    quat = quat + b_ref[...].astype(jnp.float32)

    # F.normalize(quat, dim=1, eps=1e-12): x / max(||x||, eps)  ==  x * rsqrt(max(||x||^2, eps^2))
    sq_norm = jnp.sum(quat * quat, axis=-1, keepdims=True)
    inv_norm = lax.rsqrt(jnp.maximum(sq_norm, 1e-24))
    out_ref[...] = (quat * inv_norm).astype(out_ref.dtype)


def quat_predictor(feat, weight, bias, *, block_b=1024):
    """feat: (B, nz_feat); weight: (nz_rot, nz_feat) [torch layout]; bias: (nz_rot,)."""
    B, nz_feat = feat.shape
    nz_rot = weight.shape[0]

    b_2d = bias.reshape(1, nz_rot)

    # Batch tile: multiple of 8 sublanes, capped by block_b and a VMEM budget so
    # that 2 (double-buffer) * TB * nz_feat * itemsize stays <= ~16 MiB — safe
    # under the default scoped VMEM limit on v5e/v6e (128 MiB) and v7x (64 MiB).
    itemsize = jnp.dtype(feat.dtype).itemsize
    vmem_cap_rows = max(8, (16 * 1024 * 1024) // (2 * nz_feat * itemsize))
    tb = min(block_b, vmem_cap_rows, max(8, -(-B // 8) * 8))
    tb = max(8, (tb // 8) * 8)

    # Pad batch up to a multiple of the tile (padded rows are sliced off below).
    b_pad = -(-B // tb) * tb
    if b_pad != B:
        feat = jnp.pad(feat, ((0, b_pad - B), (0, 0)))

    out = pl.pallas_call(
        _quat_predictor_kernel,
        out_shape=jax.ShapeDtypeStruct((b_pad, nz_rot), feat.dtype),
        grid=(b_pad // tb,),
        in_specs=[
            pl.BlockSpec((tb, nz_feat), lambda i: (i, 0)),      # feat: tiled on batch
            pl.BlockSpec((nz_rot, nz_feat), lambda i: (0, 0)),  # weight: VMEM-resident
            pl.BlockSpec((1, nz_rot), lambda i: (0, 0)),        # bias:   VMEM-resident
        ],
        out_specs=pl.BlockSpec((tb, nz_rot), lambda i: (i, 0)),
        compiler_params=pltpu.CompilerParams(
            dimension_semantics=("parallel",),   # batch tiles are independent (megacore on v7x)
        ),
    )(feat, weight, b_2d)

    return out[:B] if b_pad != B else out


def quat_predictor_ref(feat, weight, bias):
    """Pure-JAX reference matching the PyTorch forward (classify_rot=False)."""
    quat = feat @ weight.T + bias
    norm = jnp.sqrt(jnp.sum(quat * quat, axis=-1, keepdims=True))
    return quat / jnp.maximum(norm, 1e-12)


if __name__ == "__main__":
    key = jax.random.PRNGKey(0)
    k_feat, k_w, k_b, k_feat2 = jax.random.split(key, 4)

    # --- Test 1: shapes matching the module defaults (small) ---
    B = 8          # batch of feature vectors
    nz_feat = 32   # feature dim (module __init__ arg)
    nz_rot = 4     # quaternion output dim

    # PyTorch Linear default init: U(-1/sqrt(fan_in), 1/sqrt(fan_in))
    bound = 1.0 / jnp.sqrt(jnp.float32(nz_feat))
    weight = jax.random.uniform(k_w, (nz_rot, nz_feat), jnp.float32, -bound, bound)
    bias = jax.random.uniform(k_b, (nz_rot,), jnp.float32, -bound, bound)
    feat = jax.random.normal(k_feat, (B, nz_feat), jnp.float32)

    out = jax.block_until_ready(quat_predictor(feat, weight, bias))
    ref = quat_predictor_ref(feat, weight, bias)
    assert out.shape == (B, nz_rot)
    assert jnp.allclose(out, ref, atol=1e-5, rtol=1e-5), "mismatch vs reference (test 1)"

    # --- Test 2: exercise batch tiling + padding (B not a multiple of the tile) ---
    B2 = 200
    feat2 = jax.random.normal(k_feat2, (B2, nz_feat), jnp.float32)
    out2 = jax.block_until_ready(quat_predictor(feat2, weight, bias, block_b=64))
    ref2 = quat_predictor_ref(feat2, weight, bias)
    assert out2.shape == (B2, nz_rot)
    assert jnp.allclose(out2, ref2, atol=1e-5, rtol=1e-5), "mismatch vs reference (test 2)"

    # TODO(synk): classify_rot=True branch (log_softmax) not exercised; default path implemented.
    print("KERNEL_OK")
</pallas_src>

<mosaic_0001>
module attributes {stable_mosaic.version = 11 : i64} {
  func.func @_quat_predictor_kernel(%arg0: i32, %arg1: memref<8x32xf32, #tpu.memory_space<vmem>>, %arg2: memref<4x32xf32, #tpu.memory_space<vmem>>, %arg3: memref<1x4xf32, #tpu.memory_space<vmem>>, %arg4: memref<8x4xf32, #tpu.memory_space<vmem>>) attributes {dimension_semantics = [#tpu.dimension_semantics<parallel>], iteration_bounds = array<i64: 1>, scalar_prefetch = 0 : i64, scratch_operands = 0 : i64, tpu.core_type = #tpu.core_type<tc>, window_params = [{transform_indices = @transform_0, window_bounds = array<i64: 8, 32>}, {pipeline_mode = #tpu.pipeline_mode<synchronous>, transform_indices = @transform_1, window_bounds = array<i64: 4, 32>}, {pipeline_mode = #tpu.pipeline_mode<synchronous>, transform_indices = @transform_2, window_bounds = array<i64: 1, 4>}, {transform_indices = @transform_3, window_bounds = array<i64: 8, 4>}]} {
    %c0 = arith.constant 0 : index
    %c0_0 = arith.constant 0 : index
    %0 = vector.load %arg1[%c0, %c0_0] : memref<8x32xf32, #tpu.memory_space<vmem>>, vector<8x32xf32>
    %c0_1 = arith.constant 0 : index
    %c0_2 = arith.constant 0 : index
    %1 = vector.load %arg2[%c0_1, %c0_2] : memref<4x32xf32, #tpu.memory_space<vmem>>, vector<4x32xf32>
    %cst = arith.constant dense<0.000000e+00> : vector<8x4xf32>
    %2 = tpu.matmul %0, %1, %cst {dimension_numbers = #tpu.dot_dimension_numbers<[1], [1], [0], [0], [0, 0, 1, 0], [], []>} : vector<8x32xf32>, vector<4x32xf32>, vector<8x4xf32> -> vector<8x4xf32>
    %c0_3 = arith.constant 0 : index
    %c0_4 = arith.constant 0 : index
    %3 = vector.load %arg3[%c0_3, %c0_4] : memref<1x4xf32, #tpu.memory_space<vmem>>, vector<1x4xf32>
    %4 = vector.broadcast %3 : vector<1x4xf32> to vector<8x4xf32>
    %5 = arith.addf %2, %4 : vector<8x4xf32>
    %6 = arith.mulf %5, %5 : vector<8x4xf32>
    %cst_5 = arith.constant dense<0.000000e+00> : vector<8xf32>
    %7 = vector.multi_reduction <add>, %6, %cst_5 [1] : vector<8x4xf32> to vector<8xf32>
    %8 = vector.shape_cast %7 : vector<8xf32> to vector<8x1xf32>
    %cst_6 = arith.constant 1.000000e-24 : f32
    %9 = vector.broadcast %cst_6 : f32 to vector<8x1xf32>
    %10 = arith.maximumf %8, %9 : vector<8x1xf32>
    %11 = math.rsqrt %10 : vector<8x1xf32>
    %12 = vector.broadcast %11 : vector<8x1xf32> to vector<8x4xf32>
    %13 = arith.mulf %5, %12 : vector<8x4xf32>
    %c0_7 = arith.constant 0 : index
    %c0_8 = arith.constant 0 : index
    %14 = vector.load %arg4[%c0_7, %c0_8] : memref<8x4xf32, #tpu.memory_space<vmem>>, vector<8x4xf32>
    tpu.vector_store %arg4[%c0_7, %c0_8], %13 {strides = array<i32>} : memref<8x4xf32, #tpu.memory_space<vmem>>, vector<8x4xf32>,
    return
  }
  func.func @transform_0(%arg0: i32) -> (i32, i32) {
    %c0_i32 = arith.constant 0 : i32
    %c0_i32_0 = arith.constant 0 : i32
    return %arg0, %c0_i32 : i32, i32
  }
  func.func @transform_1(%arg0: i32) -> (i32, i32) {
    %c0_i32 = arith.constant 0 : i32
    %c0_i32_0 = arith.constant 0 : i32
    %c0_i32_1 = arith.constant 0 : i32
    return %c0_i32, %c0_i32_0 : i32, i32
  }
  func.func @transform_2(%arg0: i32) -> (i32, i32) {
    %c0_i32 = arith.constant 0 : i32
    %c0_i32_0 = arith.constant 0 : i32
    %c0_i32_1 = arith.constant 0 : i32
    return %c0_i32, %c0_i32_0 : i32, i32
  }
  func.func @transform_3(%arg0: i32) -> (i32, i32) {
    %c0_i32 = arith.constant 0 : i32
    %c0_i32_0 = arith.constant 0 : i32
    return %arg0, %c0_i32 : i32, i32
  }
}

</mosaic_0001>

<llo_original>
// kernel: tpu_custom_call.1
$region0: #{tpu_custom_call.1}
  #allocation0 [shape = 'u32[]', space=smem, size = 0x4, offset = 0x4, fixed_abs, tag = 'smem constant byte address 0x4 - core index']
  #allocation1 [shape = 'u32[72,128]{1,0:T(1,128)}', space=vmem, size = 0x9000, scoped, tag = 'internal scratch']
  %s0 = inlined_call_operand.hbm [shape: f32[8,32], index: 0, kind: input, shape index: {}]
  %s1 = inlined_call_operand.hbm [shape: f32[4,32], index: 1, kind: input, shape index: {}]
  %s2 = inlined_call_operand.vmem [shape: f32[1,4], index: 2, kind: input, shape index: {}]
  %s3 = inlined_call_operand.vmem [shape: f32[8,4], index: 3, kind: output, shape index: {}]
  %s4 = sld [smem:[#allocation0]]
  $region30: #{tpu_custom_call.1} parent=0
    _
  %s6 = ssub.s32 1, %s4
  %s7 = scalar_select 0, %s6, %s4
  $region1: #{tpu_custom_call.1} parent=0
    #allocation2 [shape = 'u8[4096]{0}', space=vmem, size = 0x1000, scoped, tag = 'input window, operand 0, single buffered']
    #allocation3 [shape = 's32[1]{0}', space=sflag, size = 0x4, scoped, tag = 'scoped memory for tpu_custom_call.1']
    #allocation4 [shape = 'u8[2048]{0}', space=vmem, size = 0x800, scoped, tag = 'input window, operand 1, single buffered']
    #allocation5 [shape = 's32[1]{0}', space=sflag, size = 0x4, scoped, tag = 'scoped memory for tpu_custom_call.1']
    %8 = vsyncpa [#allocation3], 0
    %9 = vsyncpa [#allocation5], 0
    // Predicated region
    $region2: #{tpu_custom_call.1} parent=1 // pred_check
      _
    $region3: #{tpu_custom_call.1} parent=1 // pred_check_branch
      %11 = sbr.rel (0) target = $region5
    $region4: #{tpu_custom_call.1} parent=1 // pred_region
      %13 = vsyncadd [#allocation3], 0
      %s15 = sshll.u32 %s0, 4
      %s16 = int_to_ptr.hbm [resolvable:$true] %s15
      %s17 = sshll.u32 [#allocation2], 4
      %s18 = int_to_ptr.vmem [resolvable:$true] %s17
      %20 = dma.hbm_to_vmem [thread:$0]  %s16, 128, %s18, [#allocation3]
    $region5: #{tpu_custom_call.1} parent=1 // pred_fallthru
      _
    // Predicated region
    $region6: #{tpu_custom_call.1} parent=1 // pred_check
      _
    $region7: #{tpu_custom_call.1} parent=1 // pred_check_branch
      %22 = sbr.rel (0) target = $region9
    $region8: #{tpu_custom_call.1} parent=1 // pred_region
      %24 = vsyncadd [#allocation5], 0
      %s26 = sshll.u32 %s1, 4
      %s27 = int_to_ptr.hbm [resolvable:$true] %s26
      %s28 = sshll.u32 [#allocation4], 4
      %s29 = int_to_ptr.vmem [resolvable:$true] %s28
      %31 = dma.hbm_to_vmem [thread:$0]  %s27, 64, %s29, [#allocation5]
    $region9: #{tpu_custom_call.1} parent=1 // pred_fallthru
      _
    // Predicated region
    $region10: #{tpu_custom_call.1} parent=1 // pred_check
      _
    $region11: #{tpu_custom_call.1} parent=1 // pred_check_branch
      %33 = sbr.rel (0) target = $region13
    $region12: #{tpu_custom_call.1} parent=1 // pred_region
      _
    $region13: #{tpu_custom_call.1} parent=1 // pred_fallthru
      _
    // Predicated region
    $region14: #{tpu_custom_call.1} parent=1 // pred_check
      _
    $region15: #{tpu_custom_call.1} parent=1 // pred_check_branch
      %35 = sbr.rel (0) target = $region17
    $region16: #{tpu_custom_call.1} parent=1 // pred_region
      %37 = dma.done [#allocation3], 128
    $region17: #{tpu_custom_call.1} parent=1 // pred_fallthru
      _
    // Predicated region
    $region18: #{tpu_custom_call.1} parent=1 // pred_check
      _
    $region19: #{tpu_custom_call.1} parent=1 // pred_check_branch
      %39 = sbr.rel (0) target = $region21
    $region20: #{tpu_custom_call.1} parent=1 // pred_region
      %41 = dma.done [#allocation5], 64
    $region21: #{tpu_custom_call.1} parent=1 // pred_fallthru
      _
    %v42 = vld [vmem:[#allocation2] sm:$0xff]
    %v43 = vld [vmem:[#allocation4] sm:$0xf]
    %v44 = vld [vmem:[%s2] sm:$0x1]
    %v46 = vperm.slane %v44, 0
    %vm48 = vcmask 261120
    %v50 = vsel %vm48, %v42, 0
    %v53 = vsel %vm48, %v43, 0
    %55 = vmatpush.xpose.msra.mxu0 0.0
    %56 = vmatpush.xpose.msra.mxu0 0.0
    %57 = vmatpush.xpose.msra.mxu0 0.0
    %58 = vmatpush.xpose.msra.mxu0 0.0
    %59 = vmatpush.xpose.msra.mxu0 0.0
    %60 = vmatpush.xpose.msra.mxu0 0.0
    %61 = vmatpush.xpose.msra.mxu0 0.0
    %62 = vmatpush.xpose.msra.mxu0 0.0
    %63 = vmatpush.xpose.msra.mxu0 0.0
    %64 = vmatpush.xpose.msra.mxu0 0.0
    %65 = vmatpush.xpose.msra.mxu0 0.0
    %66 = vmatpush.xpose.msra.mxu0 0.0
    %67 = vmatpush.xpose.msra.mxu0 0.0
    %68 = vmatpush.xpose.msra.mxu0 0.0
    %69 = vmatpush.xpose.msra.mxu0 0.0
    %70 = vmatpush.xpose.msra.mxu0 %v53
    %71 = vmatmul.f32.gmra.mxu0 %v50
    %v72 = vpop.f32.mrf.mxu0
    %v73 = vadd.f32 %v46, %v72
    %74 = vdwg.mxu0
    %v75 = vmul.f32 %v73, %v73
    %vm76 = vcmask 31744
    %v77 = vsel %vm76, %v75, 0.0
    %78 = vadd.xlane.f32.xlu0 %v77
    %v79 = vpop.xlane.xlu0 %78
    %v80 = vmax.f32 %v79, 1e-24
    %v81 = vrsqrt.pop %v80
    %v82 = vmul.f32 %v81, %v80
    %v83 = vmul.f32 %v82, %v81
    %v84 = vmul.f32 0.5, %v83
    %v85 = vsub.f32 1.5, %v84
    %v86 = vmul.f32 %v81, %v85
    %vm87 = vweird.f32 %v80
    %vm88 = vweird.f32 %v81
    %vm89 = vmor %vm87, %vm88
    %v90 = vsel %vm89, %v81, %v86
    %v91 = vmul.f32 %v73, %v90
    %92 = vst.msk [vmem:[%s3] sm:$0xff] %vm76, %v91
    // Predicated region
    $region22: #{tpu_custom_call.1} parent=1 // pred_check
      _
    $region23: #{tpu_custom_call.1} parent=1 // pred_check_branch
      %94 = sbr.rel (0) target = $region25
    $region24: #{tpu_custom_call.1} parent=1 // pred_region
      _
    $region25: #{tpu_custom_call.1} parent=1 // pred_fallthru
      _
    // Predicated region
    $region26: #{tpu_custom_call.1} parent=1 // pred_check
      _
    $region27: #{tpu_custom_call.1} parent=1 // pred_check_branch
      %96 = sbr.rel (0) target = $region29
    $region28: #{tpu_custom_call.1} parent=1 // pred_region
      _
    $region29: #{tpu_custom_call.1} parent=1 // pred_fallthru
      _
    %97 = vsyncpa [#allocation3], 1
    %98 = vsyncpa [#allocation5], 1

</llo_original>
